<compile_context>
chip_gen: v5e
topology: v5e:2x2
jax: 0.10.0
libtpu: 0.0.40
codegen_flags: <defaults>
</compile_context>

<pallas_src>
import functools

import jax
import jax.numpy as jnp
from jax import lax
from jax.experimental import pallas as pl
from jax.experimental.pallas import tpu as pltpu


def _termination_kernel(states_ref, actions_ref,
                        w1_ref, b1_ref, w2_ref, b2_ref, w3_ref, b3_ref,
                        out_ref, *, apply_sigmoid):
    # Matmuls in bf16 on the MXU (f32 accumulation); everything else f32.
    x = states_ref[...].astype(jnp.bfloat16)                             # [TB, S]

    h1 = jnp.dot(x, w1_ref[...], preferred_element_type=jnp.float32)     # [TB, F1]
    h1 = jnp.maximum(h1 + b1_ref[...], 0.0)                              # relu (f32)

    h2 = jnp.dot(h1.astype(jnp.bfloat16), w2_ref[...],
                 preferred_element_type=jnp.float32)                     # [TB, F2]
    h2 = jnp.maximum(h2 + b2_ref[...], 0.0)                              # relu (f32)

    logits = jnp.dot(h2.astype(jnp.bfloat16), w3_ref[...],
                     preferred_element_type=jnp.float32) + b3_ref[...]   # [TB, A]

    # gather(1, actions.unsqueeze(1)) -> pick logits[r, actions[r]] per row.
    TB, A = logits.shape
    col_ids = lax.broadcasted_iota(jnp.int32, (TB, A), 1)
    mask = col_ids == actions_ref[...]                # [TB, A] via [TB, 1] broadcast
    gathered = jnp.sum(jnp.where(mask, logits, 0.0), axis=1, keepdims=True)

    if apply_sigmoid:
        gathered = jax.nn.sigmoid(gathered)

    out_ref[...] = gathered                                              # [TB, 1]


def dense_termination_forward(states, actions, params, mode="probs",
                              block_batch=256):
    """states: [B, state_size] float32, actions: [B] int -> [B] float32."""
    assert mode in ("logits", "probs")
    assert states.ndim == 2, states.shape
    assert actions.ndim == 1, actions.shape

    w1, b1, w2, b2, w3, b3 = params
    B, S = states.shape
    F1, F2, A = w1.shape[1], w2.shape[1], w3.shape[1]

    if actions.dtype != jnp.int32:
        actions = actions.astype(jnp.int32)
    actions_2d = actions.reshape(B, 1)

    # Batch tile: modest (keeps h1 [TB, F1] f32 vreg/VMEM pressure low) but
    # past the per-grid-step overhead knee; TB == B (full dim) is always legal.
    TB = min(block_batch, B)
    grid = (pl.cdiv(B, TB),)

    def row_spec(width):
        return pl.BlockSpec((TB, width), lambda i: (i, 0))

    def resident(arr):  # whole array, same block every grid step -> fetched once
        return pl.BlockSpec(arr.shape, lambda i: (0, 0))

    flops = 2 * B * (S * F1 + F1 * F2 + F2 * A)
    bytes_accessed = (states.size * states.dtype.itemsize
                      + actions_2d.size * actions_2d.dtype.itemsize
                      + sum(p.size * p.dtype.itemsize for p in params)
                      + B * 4)
    cost = pl.CostEstimate(flops=flops,
                           transcendentals=B if mode == "probs" else 0,
                           bytes_accessed=bytes_accessed)

    kernel = functools.partial(_termination_kernel,
                               apply_sigmoid=(mode == "probs"))

    out = pl.pallas_call(
        kernel,
        out_shape=jax.ShapeDtypeStruct((B, 1), jnp.float32),
        grid=grid,
        in_specs=[row_spec(S), row_spec(1),
                  resident(w1), resident(b1),
                  resident(w2), resident(b2),
                  resident(w3), resident(b3)],
        out_specs=row_spec(1),
        compiler_params=pltpu.CompilerParams(
            dimension_semantics=("parallel",)),
        cost_estimate=cost,
    )(states, actions_2d, w1, b1, w2, b2, w3, b3)

    return out[:, 0]  # squeeze(1)


def init_params(key, state_size, action_size, fc1_units=256, fc2_units=128):
    """PyTorch nn.Linear-style init (U(-1/sqrt(fan_in), +)); weights stored
    [in, out] and cast ONCE to bf16 (biases kept f32)."""
    def linear(key, fan_in, fan_out):
        kw, kb = jax.random.split(key)
        bound = 1.0 / jnp.sqrt(fan_in)
        w = jax.random.uniform(kw, (fan_in, fan_out), jnp.float32, -bound, bound)
        b = jax.random.uniform(kb, (1, fan_out), jnp.float32, -bound, bound)
        return w.astype(jnp.bfloat16), b

    k1, k2, k3 = jax.random.split(key, 3)
    w1, b1 = linear(k1, state_size, fc1_units)
    w2, b2 = linear(k2, fc1_units, fc2_units)
    w3, b3 = linear(k3, fc2_units, action_size)
    return (w1, b1, w2, b2, w3, b3)


def _reference_forward(states, actions, params, mode="probs"):
    """Pure-JAX reference mirroring the kernel's bf16-matmul / f32-accum math."""
    w1, b1, w2, b2, w3, b3 = params
    x = states.astype(jnp.bfloat16)
    h1 = jnp.maximum(jnp.dot(x, w1, preferred_element_type=jnp.float32) + b1, 0.0)
    h2 = jnp.maximum(jnp.dot(h1.astype(jnp.bfloat16), w2,
                             preferred_element_type=jnp.float32) + b2, 0.0)
    logits = jnp.dot(h2.astype(jnp.bfloat16), w3,
                     preferred_element_type=jnp.float32) + b3
    g = jnp.take_along_axis(logits, actions[:, None].astype(jnp.int32), axis=1)[:, 0]
    return jax.nn.sigmoid(g) if mode == "probs" else g


if __name__ == "__main__":
    state_size = 32
    action_size = 4

    key = jax.random.PRNGKey(0)
    k_params, k_data = jax.random.split(key)
    params = init_params(k_params, state_size, action_size)

    # (batch=8, single tile) and (batch=300, block=128) to exercise the batch
    # grid, resident weights and a partial last tile.
    for batch, tb in ((8, 256), (300, 128)):
        ks, ka = jax.random.split(jax.random.fold_in(k_data, batch))
        states = jax.random.normal(ks, (batch, state_size), jnp.float32)
        actions = jax.random.randint(ka, (batch,), 0, action_size, jnp.int32)

        probs = dense_termination_forward(states, actions, params,
                                          mode="probs", block_batch=tb)
        logits = dense_termination_forward(states, actions, params,
                                           mode="logits", block_batch=tb)
        jax.block_until_ready((probs, logits))

        ref_probs = _reference_forward(states, actions, params, mode="probs")
        ref_logits = _reference_forward(states, actions, params, mode="logits")
        assert probs.shape == (batch,) and logits.shape == (batch,)
        assert jnp.allclose(probs, ref_probs, atol=1e-3, rtol=1e-3)
        assert jnp.allclose(logits, ref_logits, atol=1e-3, rtol=1e-3)

    print("KERNEL_OK")
</pallas_src>

<mosaic_0001>
module attributes {stable_mosaic.version = 11 : i64} {
  func.func @_termination_kernel(%arg0: i32, %arg1: memref<8x32xf32, #tpu.memory_space<vmem>>, %arg2: memref<8x1xi32, #tpu.memory_space<vmem>>, %arg3: memref<32x256xbf16, #tpu.memory_space<vmem>>, %arg4: memref<1x256xf32, #tpu.memory_space<vmem>>, %arg5: memref<256x128xbf16, #tpu.memory_space<vmem>>, %arg6: memref<1x128xf32, #tpu.memory_space<vmem>>, %arg7: memref<128x4xbf16, #tpu.memory_space<vmem>>, %arg8: memref<1x4xf32, #tpu.memory_space<vmem>>, %arg9: memref<8x1xf32, #tpu.memory_space<vmem>>) attributes {dimension_semantics = [#tpu.dimension_semantics<parallel>], iteration_bounds = array<i64: 1>, scalar_prefetch = 0 : i64, scratch_operands = 0 : i64, tpu.core_type = #tpu.core_type<tc>, window_params = [{transform_indices = @transform_0, window_bounds = array<i64: 8, 32>}, {transform_indices = @transform_1, window_bounds = array<i64: 8, 1>}, {pipeline_mode = #tpu.pipeline_mode<synchronous>, transform_indices = @transform_2, window_bounds = array<i64: 32, 256>}, {pipeline_mode = #tpu.pipeline_mode<synchronous>, transform_indices = @transform_3, window_bounds = array<i64: 1, 256>}, {pipeline_mode = #tpu.pipeline_mode<synchronous>, transform_indices = @transform_4, window_bounds = array<i64: 256, 128>}, {pipeline_mode = #tpu.pipeline_mode<synchronous>, transform_indices = @transform_5, window_bounds = array<i64: 1, 128>}, {pipeline_mode = #tpu.pipeline_mode<synchronous>, transform_indices = @transform_6, window_bounds = array<i64: 128, 4>}, {pipeline_mode = #tpu.pipeline_mode<synchronous>, transform_indices = @transform_7, window_bounds = array<i64: 1, 4>}, {transform_indices = @transform_8, window_bounds = array<i64: 8, 1>}]} {
    %c0 = arith.constant 0 : index
    %c0_0 = arith.constant 0 : index
    %0 = vector.load %arg1[%c0, %c0_0] : memref<8x32xf32, #tpu.memory_space<vmem>>, vector<8x32xf32>
    %1 = arith.truncf %0 : vector<8x32xf32> to vector<8x32xbf16>
    %c0_1 = arith.constant 0 : index
    %c0_2 = arith.constant 0 : index
    %2 = vector.load %arg3[%c0_1, %c0_2] : memref<32x256xbf16, #tpu.memory_space<vmem>>, vector<32x256xbf16>
    %cst = arith.constant dense<0.000000e+00> : vector<8x256xf32>
    %3 = tpu.matmul %1, %2, %cst {dimension_numbers = #tpu.dot_dimension_numbers<[1], [0], [0], [1], [0, 0, 1, 1], [], []>} : vector<8x32xbf16>, vector<32x256xbf16>, vector<8x256xf32> -> vector<8x256xf32>
    %c0_3 = arith.constant 0 : index
    %c0_4 = arith.constant 0 : index
    %4 = vector.load %arg4[%c0_3, %c0_4] : memref<1x256xf32, #tpu.memory_space<vmem>>, vector<1x256xf32>
    %5 = vector.broadcast %4 : vector<1x256xf32> to vector<8x256xf32>
    %6 = arith.addf %3, %5 : vector<8x256xf32>
    %cst_5 = arith.constant 0.000000e+00 : f32
    %7 = vector.broadcast %cst_5 : f32 to vector<8x256xf32>
    %8 = arith.maximumf %6, %7 : vector<8x256xf32>
    %9 = arith.truncf %8 : vector<8x256xf32> to vector<8x256xbf16>
    %c0_6 = arith.constant 0 : index
    %c0_7 = arith.constant 0 : index
    %10 = vector.load %arg5[%c0_6, %c0_7] : memref<256x128xbf16, #tpu.memory_space<vmem>>, vector<256x128xbf16>
    %cst_8 = arith.constant dense<0.000000e+00> : vector<8x128xf32>
    %11 = tpu.matmul %9, %10, %cst_8 {dimension_numbers = #tpu.dot_dimension_numbers<[1], [0], [0], [1], [0, 0, 1, 1], [], []>} : vector<8x256xbf16>, vector<256x128xbf16>, vector<8x128xf32> -> vector<8x128xf32>
    %c0_9 = arith.constant 0 : index
    %c0_10 = arith.constant 0 : index
    %12 = vector.load %arg6[%c0_9, %c0_10] : memref<1x128xf32, #tpu.memory_space<vmem>>, vector<1x128xf32>
    %13 = vector.broadcast %12 : vector<1x128xf32> to vector<8x128xf32>
    %14 = arith.addf %11, %13 : vector<8x128xf32>
    %cst_11 = arith.constant 0.000000e+00 : f32
    %15 = vector.broadcast %cst_11 : f32 to vector<8x128xf32>
    %16 = arith.maximumf %14, %15 : vector<8x128xf32>
    %17 = arith.truncf %16 : vector<8x128xf32> to vector<8x128xbf16>
    %c0_12 = arith.constant 0 : index
    %c0_13 = arith.constant 0 : index
    %18 = vector.load %arg7[%c0_12, %c0_13] : memref<128x4xbf16, #tpu.memory_space<vmem>>, vector<128x4xbf16>
    %cst_14 = arith.constant dense<0.000000e+00> : vector<8x4xf32>
    %19 = tpu.matmul %17, %18, %cst_14 {dimension_numbers = #tpu.dot_dimension_numbers<[1], [0], [0], [1], [0, 0, 1, 1], [], []>} : vector<8x128xbf16>, vector<128x4xbf16>, vector<8x4xf32> -> vector<8x4xf32>
    %c0_15 = arith.constant 0 : index
    %c0_16 = arith.constant 0 : index
    %20 = vector.load %arg8[%c0_15, %c0_16] : memref<1x4xf32, #tpu.memory_space<vmem>>, vector<1x4xf32>
    %21 = vector.broadcast %20 : vector<1x4xf32> to vector<8x4xf32>
    %22 = arith.addf %19, %21 : vector<8x4xf32>
    %23 = tpu.iota {dimensions = array<i32: 1>} : vector<8x4xi32>
    %c0_17 = arith.constant 0 : index
    %c0_18 = arith.constant 0 : index
    %24 = vector.load %arg2[%c0_17, %c0_18] : memref<8x1xi32, #tpu.memory_space<vmem>>, vector<8x1xi32>
    %25 = vector.broadcast %24 : vector<8x1xi32> to vector<8x4xi32>
    %26 = arith.cmpi eq, %23, %25 : vector<8x4xi32>
    %cst_19 = arith.constant 0.000000e+00 : f32
    %27 = vector.broadcast %cst_19 : f32 to vector<8x4xf32>
    %28 = arith.select %26, %22, %27 : vector<8x4xi1>, vector<8x4xf32>
    %cst_20 = arith.constant dense<0.000000e+00> : vector<8xf32>
    %29 = vector.multi_reduction <add>, %28, %cst_20 [1] : vector<8x4xf32> to vector<8xf32>
    %30 = vector.shape_cast %29 : vector<8xf32> to vector<8x1xf32>
    %31 = arith.negf %30 : vector<8x1xf32>
    %32 = math.exp %31 : vector<8x1xf32>
    %cst_21 = arith.constant 1.000000e+00 : f32
    %33 = vector.broadcast %cst_21 : f32 to vector<8x1xf32>
    %34 = arith.addf %33, %32 : vector<8x1xf32>
    %35 = arith.divf %33, %34 : vector<8x1xf32>
    %c0_22 = arith.constant 0 : index
    %c0_23 = arith.constant 0 : index
    %36 = vector.load %arg9[%c0_22, %c0_23] : memref<8x1xf32, #tpu.memory_space<vmem>>, vector<8x1xf32>
    tpu.vector_store %arg9[%c0_22, %c0_23], %35 {strides = array<i32>} : memref<8x1xf32, #tpu.memory_space<vmem>>, vector<8x1xf32>,
    return
  }
  func.func @transform_0(%arg0: i32) -> (i32, i32) {
    %c0_i32 = arith.constant 0 : i32
    %c0_i32_0 = arith.constant 0 : i32
    return %arg0, %c0_i32 : i32, i32
  }
  func.func @transform_1(%arg0: i32) -> (i32, i32) {
    %c0_i32 = arith.constant 0 : i32
    %c0_i32_0 = arith.constant 0 : i32
    return %arg0, %c0_i32 : i32, i32
  }
  func.func @transform_2(%arg0: i32) -> (i32, i32) {
    %c0_i32 = arith.constant 0 : i32
    %c0_i32_0 = arith.constant 0 : i32
    %c0_i32_1 = arith.constant 0 : i32
    return %c0_i32, %c0_i32_0 : i32, i32
  }
  func.func @transform_3(%arg0: i32) -> (i32, i32) {
    %c0_i32 = arith.constant 0 : i32
    %c0_i32_0 = arith.constant 0 : i32
    %c0_i32_1 = arith.constant 0 : i32
    return %c0_i32, %c0_i32_0 : i32, i32
  }
  func.func @transform_4(%arg0: i32) -> (i32, i32) {
    %c0_i32 = arith.constant 0 : i32
    %c0_i32_0 = arith.constant 0 : i32
    %c0_i32_1 = arith.constant 0 : i32
    return %c0_i32, %c0_i32_0 : i32, i32
  }
  func.func @transform_5(%arg0: i32) -> (i32, i32) {
    %c0_i32 = arith.constant 0 : i32
    %c0_i32_0 = arith.constant 0 : i32
    %c0_i32_1 = arith.constant 0 : i32
    return %c0_i32, %c0_i32_0 : i32, i32
  }
  func.func @transform_6(%arg0: i32) -> (i32, i32) {
    %c0_i32 = arith.constant 0 : i32
    %c0_i32_0 = arith.constant 0 : i32
    %c0_i32_1 = arith.constant 0 : i32
    return %c0_i32, %c0_i32_0 : i32, i32
  }
  func.func @transform_7(%arg0: i32) -> (i32, i32) {
    %c0_i32 = arith.constant 0 : i32
    %c0_i32_0 = arith.constant 0 : i32
    %c0_i32_1 = arith.constant 0 : i32
    return %c0_i32, %c0_i32_0 : i32, i32
  }
  func.func @transform_8(%arg0: i32) -> (i32, i32) {
    %c0_i32 = arith.constant 0 : i32
    %c0_i32_0 = arith.constant 0 : i32
    return %arg0, %c0_i32 : i32, i32
  }
}

</mosaic_0001>

<llo_original>
// kernel: tpu_custom_call.1
$region0: #{tpu_custom_call.1}
  #allocation0 [shape = 'u32[]', space=smem, size = 0x4, offset = 0x4, fixed_abs, tag = 'smem constant byte address 0x4 - core index']
  #allocation1 [shape = 'u32[72,128]{1,0:T(1,128)}', space=vmem, size = 0x9000, scoped, tag = 'internal scratch']
  %s0 = inlined_call_operand.vmem [shape: f32[8,32], index: 0, kind: input, shape index: {}]
  %s1 = inlined_call_operand.vmem [shape: s32[8,1], index: 1, kind: input, shape index: {}]
  %s2 = inlined_call_operand.vmem [shape: bf16[32,256], index: 2, kind: input, shape index: {}]
  %s3 = inlined_call_operand.vmem [shape: f32[1,256], index: 3, kind: input, shape index: {}]
  %s4 = inlined_call_operand.hbm [shape: bf16[256,128], index: 4, kind: input, shape index: {}]
  %s5 = inlined_call_operand.vmem [shape: f32[1,128], index: 5, kind: input, shape index: {}]
  %s6 = inlined_call_operand.vmem [shape: bf16[128,4], index: 6, kind: input, shape index: {}]
  %s7 = inlined_call_operand.vmem [shape: f32[1,4], index: 7, kind: input, shape index: {}]
  %s8 = inlined_call_operand.vmem [shape: f32[8,1], index: 8, kind: output, shape index: {}]
  %s9 = sld [smem:[#allocation0]]
  $region46: #{tpu_custom_call.1} parent=0
    _
  %s11 = ssub.s32 1, %s9
  %s12 = scalar_select 0, %s11, %s9
  $region1: #{tpu_custom_call.1} parent=0
    #allocation2 [shape = 'u8[65536]{0}', space=vmem, size = 0x10000, scoped, tag = 'input window, operand 4, single buffered']
    #allocation3 [shape = 's32[1]{0}', space=sflag, size = 0x4, scoped, tag = 'scoped memory for tpu_custom_call.1']
    %13 = vsyncpa [#allocation3], 0
    // Predicated region
    $region2: #{tpu_custom_call.1} parent=1 // pred_check
      _
    $region3: #{tpu_custom_call.1} parent=1 // pred_check_branch
      %15 = sbr.rel (0) target = $region5
    $region4: #{tpu_custom_call.1} parent=1 // pred_region
      _
    $region5: #{tpu_custom_call.1} parent=1 // pred_fallthru
      _
    // Predicated region
    $region6: #{tpu_custom_call.1} parent=1 // pred_check
      _
    $region7: #{tpu_custom_call.1} parent=1 // pred_check_branch
      %17 = sbr.rel (0) target = $region9
    $region8: #{tpu_custom_call.1} parent=1 // pred_region
      _
    $region9: #{tpu_custom_call.1} parent=1 // pred_fallthru
      _
    // Predicated region
    $region10: #{tpu_custom_call.1} parent=1 // pred_check
      _
    $region11: #{tpu_custom_call.1} parent=1 // pred_check_branch
      %19 = sbr.rel (0) target = $region13
    $region12: #{tpu_custom_call.1} parent=1 // pred_region
      _
    $region13: #{tpu_custom_call.1} parent=1 // pred_fallthru
      _
    // Predicated region
    $region14: #{tpu_custom_call.1} parent=1 // pred_check
      _
    $region15: #{tpu_custom_call.1} parent=1 // pred_check_branch
      %21 = sbr.rel (0) target = $region17
    $region16: #{tpu_custom_call.1} parent=1 // pred_region
      _
    $region17: #{tpu_custom_call.1} parent=1 // pred_fallthru
      _
    // Predicated region
    $region18: #{tpu_custom_call.1} parent=1 // pred_check
      _
    $region19: #{tpu_custom_call.1} parent=1 // pred_check_branch
      %23 = sbr.rel (0) target = $region21
    $region20: #{tpu_custom_call.1} parent=1 // pred_region
      %25 = vsyncadd [#allocation3], 0
      %s26 = sshll.u32 %s4, 4
      %s27 = int_to_ptr.hbm [resolvable:$true] %s26
      %s28 = sshll.u32 [#allocation2], 4
      %s29 = int_to_ptr.vmem [resolvable:$true] %s28
      %34 = dma.hbm_to_vmem [thread:$0]  %s27, 2048, %s29, [#allocation3], 64, 64, 4
    $region21: #{tpu_custom_call.1} parent=1 // pred_fallthru
      _
    // Predicated region
    $region22: #{tpu_custom_call.1} parent=1 // pred_check
      _
    $region23: #{tpu_custom_call.1} parent=1 // pred_check_branch
      %36 = sbr.rel (0) target = $region25
    $region24: #{tpu_custom_call.1} parent=1 // pred_region
      _
    $region25: #{tpu_custom_call.1} parent=1 // pred_fallthru
      _
    // Predicated region
    $region26: #{tpu_custom_call.1} parent=1 // pred_check
      _
    $region27: #{tpu_custom_call.1} parent=1 // pred_check_branch
      %38 = sbr.rel (0) target = $region29
    $region28: #{tpu_custom_call.1} parent=1 // pred_region
      _
    $region29: #{tpu_custom_call.1} parent=1 // pred_fallthru
      _
    // Predicated region
    $region30: #{tpu_custom_call.1} parent=1 // pred_check
      _
    $region31: #{tpu_custom_call.1} parent=1 // pred_check_branch
      %40 = sbr.rel (0) target = $region33
    $region32: #{tpu_custom_call.1} parent=1 // pred_region
      _
    $region33: #{tpu_custom_call.1} parent=1 // pred_fallthru
      _
    // Predicated region
    $region34: #{tpu_custom_call.1} parent=1 // pred_check
      _
    $region35: #{tpu_custom_call.1} parent=1 // pred_check_branch
      %42 = sbr.rel (0) target = $region37
    $region36: #{tpu_custom_call.1} parent=1 // pred_region
      %44 = dma.done [#allocation3], 2048
    $region37: #{tpu_custom_call.1} parent=1 // pred_fallthru
      _
    %v46 = vld [vmem:[%s0] sm:$0xff]
    %v47 = vpack.c.bf16 %v46, %v46
    %v48 = vld [vmem:[%s2] sm:$0xff]
    %v49 = vld [vmem:[%s2 + $0x8] sm:$0xff]
    %v50 = vld [vmem:[%s2 + $0x10] sm:$0xff]
    %v51 = vld [vmem:[%s2 + $0x18] sm:$0xff]
    %v52 = vld [vmem:[%s3] sm:$0x3]
    %v54 = vperm.slane %v52, 0
    %v55 = vperm.slane %v52, 1
    %v62 = vunpack.c.l.b16 %v48
    %v63 = vunpack.c.h.b16 %v48
    %v64 = vunpack.c.l.b16 %v49
    %v65 = vunpack.c.h.b16 %v49
    %v66 = vunpack.c.l.b16 %v50
    %v67 = vunpack.c.h.b16 %v50
    %v68 = vunpack.c.l.b16 %v51
    %v69 = vunpack.c.h.b16 %v51
    %v70 = vpack.c.b16 %v64, %v62
    %v71 = vpack.c.b16 %v65, %v63
    %v72 = vpack.c.b16 %v68, %v66
    %v73 = vpack.c.b16 %v69, %v67
    %vm78 = vcmask 261120
    %v80 = vsel %vm78, %v47, 0
    %82 = vmatpush.bf16.msra.mxu0 0
    %83 = vmatpush.bf16.msra.mxu0 0
    %84 = vmatpush.bf16.msra.mxu0 0
    %85 = vmatpush.bf16.msra.mxu0 0
    %86 = vmatpush.bf16.msra.mxu0 0
    %87 = vmatpush.bf16.msra.mxu0 0
    %88 = vmatpush.bf16.msra.mxu0 %v72
    %89 = vmatpush.bf16.msra.mxu0 %v70
    %90 = vmatmul.bf16.gmra.mxu0 %v80
    %v91 = vpop.f32.mrf.mxu0
    %v92 = vadd.f32 %v54, %v91
    %v93 = vpop.f32.mrf.mxu0
    %94 = vdwg.mxu0
    %95 = vmatpush.bf16.msra.mxu0 0
    %96 = vmatpush.bf16.msra.mxu0 0
    %97 = vmatpush.bf16.msra.mxu0 0
    %98 = vmatpush.bf16.msra.mxu0 0
    %99 = vmatpush.bf16.msra.mxu0 0
    %100 = vmatpush.bf16.msra.mxu0 0
    %101 = vmatpush.bf16.msra.mxu0 %v73
    %102 = vmatpush.bf16.msra.mxu0 %v71
    %103 = vmatmul.bf16.gmra.mxu0 %v80
    %v104 = vpop.f32.mrf.mxu0
    %v105 = vadd.f32 %v55, %v104
    %v106 = vpop.f32.mrf.mxu0
    %107 = vdwg.mxu0
    %v108 = vmax.f32 %v92, 0.0
    %v109 = vmax.f32 %v105, 0.0
    %v110 = vpack.c.bf16 %v108, %v108
    %v111 = vpack.c.bf16 %v109, %v109
    %v112 = vld [vmem:[#allocation2] sm:$0xf]
    %v113 = vld [vmem:[#allocation2 + $0x4] sm:$0xf]
    %v114 = vld [vmem:[#allocation2 + $0x8] sm:$0xf]
    %v115 = vld [vmem:[#allocation2 + $0xc] sm:$0xf]
    %v116 = vld [vmem:[#allocation2 + $0x10] sm:$0xf]
    %v117 = vld [vmem:[#allocation2 + $0x14] sm:$0xf]
    %v118 = vld [vmem:[#allocation2 + $0x18] sm:$0xf]
    %v119 = vld [vmem:[#allocation2 + $0x1c] sm:$0xf]
    %v120 = vld [vmem:[#allocation2 + $0x20] sm:$0xf]
    %v121 = vld [vmem:[#allocation2 + $0x24] sm:$0xf]
    %v122 = vld [vmem:[#allocation2 + $0x28] sm:$0xf]
    %v123 = vld [vmem:[#allocation2 + $0x2c] sm:$0xf]
    %v124 = vld [vmem:[#allocation2 + $0x30] sm:$0xf]
    %v125 = vld [vmem:[#allocation2 + $0x34] sm:$0xf]
    %v126 = vld [vmem:[#allocation2 + $0x38] sm:$0xf]
    %v127 = vld [vmem:[#allocation2 + $0x3c] sm:$0xf]
    %v128 = vld [vmem:[#allocation2 + $0x40] sm:$0xf]
    %v129 = vld [vmem:[#allocation2 + $0x44] sm:$0xf]
    %v130 = vld [vmem:[#allocation2 + $0x48] sm:$0xf]
    %v131 = vld [vmem:[#allocation2 + $0x4c] sm:$0xf]
    %v132 = vld [vmem:[#allocation2 + $0x50] sm:$0xf]
    %v133 = vld [vmem:[#allocation2 + $0x54] sm:$0xf]
    %v134 = vld [vmem:[#allocation2 + $0x58] sm:$0xf]
    %v135 = vld [vmem:[#allocation2 + $0x5c] sm:$0xf]
    %v136 = vld [vmem:[#allocation2 + $0x60] sm:$0xf]
    %v137 = vld [vmem:[#allocation2 + $0x64] sm:$0xf]
    %v138 = vld [vmem:[#allocation2 + $0x68] sm:$0xf]
    %v139 = vld [vmem:[#allocation2 + $0x6c] sm:$0xf]
    %v140 = vld [vmem:[#allocation2 + $0x70] sm:$0xf]
    %v141 = vld [vmem:[#allocation2 + $0x74] sm:$0xf]
    %v142 = vld [vmem:[#allocation2 + $0x78] sm:$0xf]
    %v143 = vld [vmem:[#allocation2 + $0x7c] sm:$0xf]
    %v144 = vld [vmem:[%s5] sm:$0x1]
    %v146 = vperm.slane %v144, 0
    %v180 = vunpack.c.l.b16 %v112
    %v181 = vunpack.c.l.b16 %v113
    %v182 = vunpack.c.l.b16 %v114
    %v183 = vunpack.c.l.b16 %v115
    %v184 = vunpack.c.l.b16 %v116
    %v185 = vunpack.c.l.b16 %v117
    %v186 = vunpack.c.l.b16 %v118
    %v187 = vunpack.c.l.b16 %v119
    %v188 = vunpack.c.l.b16 %v120
    %v189 = vunpack.c.l.b16 %v121
    %v190 = vunpack.c.l.b16 %v122
    %v191 = vunpack.c.l.b16 %v123
    %v192 = vunpack.c.l.b16 %v124
    %v193 = vunpack.c.l.b16 %v125
    %v194 = vunpack.c.l.b16 %v126
    %v195 = vunpack.c.l.b16 %v127
    %v196 = vunpack.c.l.b16 %v128
    %v197 = vunpack.c.l.b16 %v129
    %v198 = vunpack.c.l.b16 %v130
    %v199 = vunpack.c.l.b16 %v131
    %v200 = vunpack.c.l.b16 %v132
    %v201 = vunpack.c.l.b16 %v133
    %v202 = vunpack.c.l.b16 %v134
    %v203 = vunpack.c.l.b16 %v135
    %v204 = vunpack.c.l.b16 %v136
    %v205 = vunpack.c.l.b16 %v137
    %v206 = vunpack.c.l.b16 %v138
    %v207 = vunpack.c.l.b16 %v139
    %v208 = vunpack.c.l.b16 %v140
    %v209 = vunpack.c.l.b16 %v141
    %v210 = vunpack.c.l.b16 %v142
    %v211 = vunpack.c.l.b16 %v143
    %v212 = vpack.c.b16 %v181, %v180
    %v213 = vpack.c.b16 %v183, %v182
    %v214 = vpack.c.b16 %v185, %v184
    %v215 = vpack.c.b16 %v187, %v186
    %v216 = vpack.c.b16 %v189, %v188
    %v217 = vpack.c.b16 %v191, %v190
    %v218 = vpack.c.b16 %v193, %v192
    %v219 = vpack.c.b16 %v195, %v194
    %v220 = vpack.c.b16 %v197, %v196
    %v221 = vpack.c.b16 %v199, %v198
    %v222 = vpack.c.b16 %v201, %v200
    %v223 = vpack.c.b16 %v203, %v202
    %v224 = vpack.c.b16 %v205, %v204
    %v225 = vpack.c.b16 %v207, %v206
    %v226 = vpack.c.b16 %v209, %v208
    %v227 = vpack.c.b16 %v211, %v210
    %244 = vmatpush.bf16.msra.mxu0 %v219
    %245 = vmatpush.bf16.msra.mxu0 %v218
    %246 = vmatpush.bf16.msra.mxu0 %v217
    %247 = vmatpush.bf16.msra.mxu0 %v216
    %248 = vmatpush.bf16.msra.mxu0 %v215
    %249 = vmatpush.bf16.msra.mxu0 %v214
    %250 = vmatpush.bf16.msra.mxu0 %v213
    %251 = vmatpush.bf16.msra.mxu0 %v212
    %252 = vmatmul.bf16.gmra.mxu0 %v110
    %v253 = vpop.f32.mrf.mxu0
    %v254 = vadd.f32 %v146, %v253
    %v255 = vpop.f32.mrf.mxu0
    %256 = vdwg.mxu0
    %257 = vmatpush.bf16.msra.mxu0 %v227
    %258 = vmatpush.bf16.msra.mxu0 %v226
    %259 = vmatpush.bf16.msra.mxu0 %v225
    %260 = vmatpush.bf16.msra.mxu0 %v224
    %261 = vmatpush.bf16.msra.mxu0 %v223
    %262 = vmatpush.bf16.msra.mxu0 %v222
    %263 = vmatpush.bf16.msra.mxu0 %v221
    %264 = vmatpush.bf16.msra.mxu0 %v220
    %265 = vmatmul.bf16.gmra.mxu0 %v111
    %v266 = vpop.f32.mrf.mxu0
    %v267 = vadd.f32 %v254, %v266
    %v268 = vpop.f32.mrf.mxu0
    %269 = vdwg.mxu0
    %v270 = vmax.f32 %v267, 0.0
    %v271 = vpack.c.bf16 %v270, %v270
    %v272 = vld [vmem:[%s6] sm:$0xf]
    %v273 = vld [vmem:[%s6 + $0x4] sm:$0xf]
    %v274 = vld [vmem:[%s6 + $0x8] sm:$0xf]
    %v275 = vld [vmem:[%s6 + $0xc] sm:$0xf]
    %v276 = vld [vmem:[%s6 + $0x10] sm:$0xf]
    %v277 = vld [vmem:[%s6 + $0x14] sm:$0xf]
    %v278 = vld [vmem:[%s6 + $0x18] sm:$0xf]
    %v279 = vld [vmem:[%s6 + $0x1c] sm:$0xf]
    %v280 = vld [vmem:[%s6 + $0x20] sm:$0xf]
    %v281 = vld [vmem:[%s6 + $0x24] sm:$0xf]
    %v282 = vld [vmem:[%s6 + $0x28] sm:$0xf]
    %v283 = vld [vmem:[%s6 + $0x2c] sm:$0xf]
    %v284 = vld [vmem:[%s6 + $0x30] sm:$0xf]
    %v285 = vld [vmem:[%s6 + $0x34] sm:$0xf]
    %v286 = vld [vmem:[%s6 + $0x38] sm:$0xf]
    %v287 = vld [vmem:[%s6 + $0x3c] sm:$0xf]
    %v288 = vld [vmem:[%s7] sm:$0x1]
    %v290 = vperm.slane %v288, 0
    %v308 = vunpack.c.l.b16 %v272
    %v309 = vunpack.c.l.b16 %v273
    %v310 = vunpack.c.l.b16 %v274
    %v311 = vunpack.c.l.b16 %v275
    %v312 = vunpack.c.l.b16 %v276
    %v313 = vunpack.c.l.b16 %v277
    %v314 = vunpack.c.l.b16 %v278
    %v315 = vunpack.c.l.b16 %v279
    %v316 = vunpack.c.l.b16 %v280
    %v317 = vunpack.c.l.b16 %v281
    %v318 = vunpack.c.l.b16 %v282
    %v319 = vunpack.c.l.b16 %v283
    %v320 = vunpack.c.l.b16 %v284
    %v321 = vunpack.c.l.b16 %v285
    %v322 = vunpack.c.l.b16 %v286
    %v323 = vunpack.c.l.b16 %v287
    %v324 = vpack.c.b16 %v309, %v308
    %v325 = vpack.c.b16 %v311, %v310
    %v326 = vpack.c.b16 %v313, %v312
    %v327 = vpack.c.b16 %v315, %v314
    %v328 = vpack.c.b16 %v317, %v316
    %v329 = vpack.c.b16 %v319, %v318
    %v330 = vpack.c.b16 %v321, %v320
    %v331 = vpack.c.b16 %v323, %v322
    %340 = vmatpush.bf16.msra.mxu0 %v331
    %341 = vmatpush.bf16.msra.mxu0 %v330
    %342 = vmatpush.bf16.msra.mxu0 %v329
    %343 = vmatpush.bf16.msra.mxu0 %v328
    %344 = vmatpush.bf16.msra.mxu0 %v327
    %345 = vmatpush.bf16.msra.mxu0 %v326
    %346 = vmatpush.bf16.msra.mxu0 %v325
    %347 = vmatpush.bf16.msra.mxu0 %v324
    %348 = vmatmul.bf16.gmra.mxu0 %v271
    %v349 = vpop.f32.mrf.mxu0
    %v350 = vadd.f32 %v290, %v349
    %v351 = vpop.f32.mrf.mxu0
    %352 = vdwg.mxu0
    %v353 = vlaneseq
    %v354 = vand.u32 %v353, 127
    %v355 = vld [vmem:[%s1] sm:$0xff]
    %356 = vset.pattern.permute.xlu0 0
    %357 = vperm.xlu0 %356, %v355
    %v358 = vpop.permute.xlu0 %357
    %vm359 = vcmp.eq.s32.totalorder %v354, %v358
    %v360 = vsel %vm359, %v350, 0.0
    %vm361 = vcmask 31744
    %v362 = vsel %vm361, %v360, 0.0
    %363 = vadd.xlane.f32.xlu0 %v362
    %v364 = vpop.xlane.xlu0 %363
    %v365 = vxor.u32 %v364, 2147483648
    %v366 = vmul.f32 %v365, 1.442695
    %v367 = vpow.pop %v366
    %v368 = vadd.f32 %v367, 1.0
    %v369 = vrcp.pop %v368
    %v370 = vmul.f32 %v368, %v369
    %v371 = vsub.f32 1.0, %v370
    %v372 = vmul.f32 %v369, %v371
    %v373 = vadd.f32 %v369, %v372
    %vm374 = vweird.f32 %v368
    %vm375 = vweird.f32 %v369
    %vm376 = vmor %vm374, %vm375
    %v377 = vsel %vm376, %v369, %v373
    %v378 = vand.u32 2147483647, %v368
    %vm379 = vcmp.eq.f32.partialorder %v378, 8.507059e+37
    %v380 = vand.u32 %v368, 2147483648
    %v381 = vor.u32 1.1754944e-38, %v380
    %v382 = vsel %vm379, %v381, %v377
    %v383 = vmul.f32 1.0, %v382
    %vm384 = vcmask 7168
    %385 = vst.msk [vmem:[%s8] sm:$0xff] %vm384, %v383
    // Predicated region
    $region38: #{tpu_custom_call.1} parent=1 // pred_check
      _
    $region39: #{tpu_custom_call.1} parent=1 // pred_check_branch
      %387 = sbr.rel (0) target = $region41
    $region40: #{tpu_custom_call.1} parent=1 // pred_region
      _
    $region41: #{tpu_custom_call.1} parent=1 // pred_fallthru
      _
    // Predicated region
    $region42: #{tpu_custom_call.1} parent=1 // pred_check
      _
    $region43: #{tpu_custom_call.1} parent=1 // pred_check_branch
      %389 = sbr.rel (0) target = $region45
    $region44: #{tpu_custom_call.1} parent=1 // pred_region
      _
    $region45: #{tpu_custom_call.1} parent=1 // pred_fallthru
      _
    %390 = vsyncpa [#allocation3], 1

</llo_original>
